<compile_context>
chip_gen: v6e
topology: v6e:2x2x1
jax: 0.10.0
libtpu: 0.0.40
codegen_flags: <defaults>
</compile_context>

<pallas_src>
import jax
import jax.numpy as jnp
from jax import lax
from jax.experimental import pallas as pl
from jax.experimental.pallas import tpu as pltpu


def _clause_encoding_kernel(idx_ref, emb_ref, out_ref):
    """idx_ref: (PK, TM) int32  packed, offset node indices (rows on lanes)
       emb_ref: (Vb, Dp) f32    block-diagonal embedding table (resident)
       out_ref: (TM, Dp) f32    packed, lane-dense output rows
    """
    idx = idx_ref[...]
    emb = emb_ref[...]
    pk, tm = idx.shape
    vb = emb.shape[0]

    # counts[v, m] = #{j : idx[j, m] == v}, built against a sublane iota so the
    # row axis stays lane-dense. Accumulate in int32, cast to f32 once.
    iota_v = lax.broadcasted_iota(jnp.int32, (vb, tm), 0)
    counts = (idx[0][None, :] == iota_v).astype(jnp.int32)
    for j in range(1, pk):  # pk is small & static -> unrolled
        counts = counts + (idx[j][None, :] == iota_v).astype(jnp.int32)
    counts = counts.astype(jnp.float32)

    # gather + sum  ==  counts^T @ emb. Contract dim 0 of both operands so no
    # explicit transpose is emitted; MXU accumulates in f32.
    out = lax.dot_general(
        counts, emb,
        dimension_numbers=(((0,), (0,)), ((), ())),
        preferred_element_type=jnp.float32,
    )
    out_ref[...] = out.astype(out_ref.dtype)


def clause_encoding(node_idx, emb_table, *, max_tile_rows=1024):
    """node_idx: [B, S, K] int, emb_table: [V, D] f32 -> [B, S, D] f32."""
    assert max_tile_rows % 128 == 0
    B, S, K = node_idx.shape
    V, D = emb_table.shape
    M = B * S

    # Row-packing factor so the output's last (lane) dim is 128-dense.
    P = 128 // D if (D < 128 and 128 % D == 0) else 1
    Dp = P * D
    Vb = P * V
    PK = P * K

    # Pad rows to a multiple of P (pad index 0 is valid; rows sliced off below).
    M_pad = ((M + P - 1) // P) * P
    idx = node_idx.reshape(M, K).astype(jnp.int32)
    if M_pad != M:
        idx = jnp.pad(idx, ((0, M_pad - M), (0, 0)))
    Mp = M_pad // P  # packed rows

    # Pack P consecutive rows into one; row r's indices get offset r*V so one
    # one-hot count over Vb = P*V types addresses a block-diagonal table.
    offs = (jnp.arange(P, dtype=jnp.int32) * V)[None, :, None]
    idx_packed = idx.reshape(Mp, P, K) + offs          # (Mp, P, K)
    idx_t = idx_packed.reshape(Mp, PK).T               # (PK, Mp): rows on lanes

    # Block-diagonal table: counts @ emb_big puts packed row r of a group into
    # lane slots [r*D, (r+1)*D) -> lane-dense (TM, 128) stores.
    if P > 1:
        emb_big = jnp.kron(jnp.eye(P, dtype=emb_table.dtype), emb_table)
    else:
        emb_big = emb_table

    # Tile the packed-row axis; single full block for small inputs.
    TM = Mp if Mp <= max_tile_rows else max_tile_rows
    grid_m = pl.cdiv(Mp, TM)

    out_packed = pl.pallas_call(
        _clause_encoding_kernel,
        out_shape=jax.ShapeDtypeStruct((Mp, Dp), jnp.float32),
        grid=(grid_m,),
        in_specs=[
            pl.BlockSpec((PK, TM), lambda i: (0, i)),   # indices: tiled along rows
            pl.BlockSpec((Vb, Dp), lambda i: (0, 0)),   # table: resident
        ],
        out_specs=pl.BlockSpec((TM, Dp), lambda i: (i, 0)),
        compiler_params=pltpu.CompilerParams(
            dimension_semantics=("parallel",),
        ),
    )(idx_t, emb_big)

    out = out_packed.reshape(M_pad, D)[:M]
    return out.reshape(B, S, D)


if __name__ == "__main__":
    # Small shapes consistent with the module's forward:
    # node_idx: [B, S, K] so the embedding output is 4-D before sum(-2).
    num_node_types = 16   # V
    model_dim = 32        # D
    B, S, K = 2, 8, 4

    key = jax.random.PRNGKey(0)
    k_emb, k_idx = jax.random.split(key)

    emb_table = jax.random.normal(k_emb, (num_node_types, model_dim),
                                  dtype=jnp.float32)
    node_idx = jax.random.randint(k_idx, (B, S, K), 0, num_node_types,
                                  dtype=jnp.int32)

    out = clause_encoding(node_idx, emb_table)
    out = jax.block_until_ready(out)

    # Reference in plain JAX: gather then sum over -2.
    ref = jnp.take(emb_table, node_idx, axis=0).sum(axis=-2)
    assert out.shape == (B, S, model_dim)
    assert jnp.allclose(out, ref, atol=1e-5, rtol=1e-5)

    print("KERNEL_OK")
</pallas_src>

<mosaic_0001>
module attributes {stable_mosaic.version = 11 : i64} {
  func.func @_clause_encoding_kernel(%arg0: i32, %arg1: memref<16x4xi32, #tpu.memory_space<vmem>>, %arg2: memref<64x128xf32, #tpu.memory_space<vmem>>, %arg3: memref<4x128xf32, #tpu.memory_space<vmem>>) attributes {dimension_semantics = [#tpu.dimension_semantics<parallel>], iteration_bounds = array<i64: 1>, scalar_prefetch = 0 : i64, scratch_operands = 0 : i64, tpu.core_type = #tpu.core_type<tc>, window_params = [{transform_indices = @transform_0, window_bounds = array<i64: 16, 4>}, {pipeline_mode = #tpu.pipeline_mode<synchronous>, transform_indices = @transform_1, window_bounds = array<i64: 64, 128>}, {transform_indices = @transform_2, window_bounds = array<i64: 4, 128>}]} {
    %c0 = arith.constant 0 : index
    %c0_0 = arith.constant 0 : index
    %0 = vector.load %arg1[%c0, %c0_0] : memref<16x4xi32, #tpu.memory_space<vmem>>, vector<16x4xi32>
    %c0_1 = arith.constant 0 : index
    %c0_2 = arith.constant 0 : index
    %1 = vector.load %arg2[%c0_1, %c0_2] : memref<64x128xf32, #tpu.memory_space<vmem>>, vector<64x128xf32>
    %2 = tpu.iota {dimensions = array<i32: 0>} : vector<64x4xi32>
    %3 = vector.extract_strided_slice %0 {offsets = [0, 0], sizes = [1, 4], strides = [1, 1]} : vector<16x4xi32> to vector<1x4xi32>
    %4 = vector.shape_cast %3 : vector<1x4xi32> to vector<4xi32>
    %5 = vector.shape_cast %4 : vector<4xi32> to vector<1x4xi32>
    %6 = vector.broadcast %5 : vector<1x4xi32> to vector<64x4xi32>
    %7 = arith.cmpi eq, %6, %2 : vector<64x4xi32>
    %8 = arith.extui %7 : vector<64x4xi1> to vector<64x4xi32>
    %9 = vector.extract_strided_slice %0 {offsets = [1, 0], sizes = [1, 4], strides = [1, 1]} : vector<16x4xi32> to vector<1x4xi32>
    %10 = vector.shape_cast %9 : vector<1x4xi32> to vector<4xi32>
    %11 = vector.shape_cast %10 : vector<4xi32> to vector<1x4xi32>
    %12 = vector.broadcast %11 : vector<1x4xi32> to vector<64x4xi32>
    %13 = arith.cmpi eq, %12, %2 : vector<64x4xi32>
    %14 = arith.extui %13 : vector<64x4xi1> to vector<64x4xi32>
    %15 = arith.addi %8, %14 : vector<64x4xi32>
    %16 = vector.extract_strided_slice %0 {offsets = [2, 0], sizes = [1, 4], strides = [1, 1]} : vector<16x4xi32> to vector<1x4xi32>
    %17 = vector.shape_cast %16 : vector<1x4xi32> to vector<4xi32>
    %18 = vector.shape_cast %17 : vector<4xi32> to vector<1x4xi32>
    %19 = vector.broadcast %18 : vector<1x4xi32> to vector<64x4xi32>
    %20 = arith.cmpi eq, %19, %2 : vector<64x4xi32>
    %21 = arith.extui %20 : vector<64x4xi1> to vector<64x4xi32>
    %22 = arith.addi %15, %21 : vector<64x4xi32>
    %23 = vector.extract_strided_slice %0 {offsets = [3, 0], sizes = [1, 4], strides = [1, 1]} : vector<16x4xi32> to vector<1x4xi32>
    %24 = vector.shape_cast %23 : vector<1x4xi32> to vector<4xi32>
    %25 = vector.shape_cast %24 : vector<4xi32> to vector<1x4xi32>
    %26 = vector.broadcast %25 : vector<1x4xi32> to vector<64x4xi32>
    %27 = arith.cmpi eq, %26, %2 : vector<64x4xi32>
    %28 = arith.extui %27 : vector<64x4xi1> to vector<64x4xi32>
    %29 = arith.addi %22, %28 : vector<64x4xi32>
    %30 = vector.extract_strided_slice %0 {offsets = [4, 0], sizes = [1, 4], strides = [1, 1]} : vector<16x4xi32> to vector<1x4xi32>
    %31 = vector.shape_cast %30 : vector<1x4xi32> to vector<4xi32>
    %32 = vector.shape_cast %31 : vector<4xi32> to vector<1x4xi32>
    %33 = vector.broadcast %32 : vector<1x4xi32> to vector<64x4xi32>
    %34 = arith.cmpi eq, %33, %2 : vector<64x4xi32>
    %35 = arith.extui %34 : vector<64x4xi1> to vector<64x4xi32>
    %36 = arith.addi %29, %35 : vector<64x4xi32>
    %37 = vector.extract_strided_slice %0 {offsets = [5, 0], sizes = [1, 4], strides = [1, 1]} : vector<16x4xi32> to vector<1x4xi32>
    %38 = vector.shape_cast %37 : vector<1x4xi32> to vector<4xi32>
    %39 = vector.shape_cast %38 : vector<4xi32> to vector<1x4xi32>
    %40 = vector.broadcast %39 : vector<1x4xi32> to vector<64x4xi32>
    %41 = arith.cmpi eq, %40, %2 : vector<64x4xi32>
    %42 = arith.extui %41 : vector<64x4xi1> to vector<64x4xi32>
    %43 = arith.addi %36, %42 : vector<64x4xi32>
    %44 = vector.extract_strided_slice %0 {offsets = [6, 0], sizes = [1, 4], strides = [1, 1]} : vector<16x4xi32> to vector<1x4xi32>
    %45 = vector.shape_cast %44 : vector<1x4xi32> to vector<4xi32>
    %46 = vector.shape_cast %45 : vector<4xi32> to vector<1x4xi32>
    %47 = vector.broadcast %46 : vector<1x4xi32> to vector<64x4xi32>
    %48 = arith.cmpi eq, %47, %2 : vector<64x4xi32>
    %49 = arith.extui %48 : vector<64x4xi1> to vector<64x4xi32>
    %50 = arith.addi %43, %49 : vector<64x4xi32>
    %51 = vector.extract_strided_slice %0 {offsets = [7, 0], sizes = [1, 4], strides = [1, 1]} : vector<16x4xi32> to vector<1x4xi32>
    %52 = vector.shape_cast %51 : vector<1x4xi32> to vector<4xi32>
    %53 = vector.shape_cast %52 : vector<4xi32> to vector<1x4xi32>
    %54 = vector.broadcast %53 : vector<1x4xi32> to vector<64x4xi32>
    %55 = arith.cmpi eq, %54, %2 : vector<64x4xi32>
    %56 = arith.extui %55 : vector<64x4xi1> to vector<64x4xi32>
    %57 = arith.addi %50, %56 : vector<64x4xi32>
    %58 = vector.extract_strided_slice %0 {offsets = [8, 0], sizes = [1, 4], strides = [1, 1]} : vector<16x4xi32> to vector<1x4xi32>
    %59 = vector.shape_cast %58 : vector<1x4xi32> to vector<4xi32>
    %60 = vector.shape_cast %59 : vector<4xi32> to vector<1x4xi32>
    %61 = vector.broadcast %60 : vector<1x4xi32> to vector<64x4xi32>
    %62 = arith.cmpi eq, %61, %2 : vector<64x4xi32>
    %63 = arith.extui %62 : vector<64x4xi1> to vector<64x4xi32>
    %64 = arith.addi %57, %63 : vector<64x4xi32>
    %65 = vector.extract_strided_slice %0 {offsets = [9, 0], sizes = [1, 4], strides = [1, 1]} : vector<16x4xi32> to vector<1x4xi32>
    %66 = vector.shape_cast %65 : vector<1x4xi32> to vector<4xi32>
    %67 = vector.shape_cast %66 : vector<4xi32> to vector<1x4xi32>
    %68 = vector.broadcast %67 : vector<1x4xi32> to vector<64x4xi32>
    %69 = arith.cmpi eq, %68, %2 : vector<64x4xi32>
    %70 = arith.extui %69 : vector<64x4xi1> to vector<64x4xi32>
    %71 = arith.addi %64, %70 : vector<64x4xi32>
    %72 = vector.extract_strided_slice %0 {offsets = [10, 0], sizes = [1, 4], strides = [1, 1]} : vector<16x4xi32> to vector<1x4xi32>
    %73 = vector.shape_cast %72 : vector<1x4xi32> to vector<4xi32>
    %74 = vector.shape_cast %73 : vector<4xi32> to vector<1x4xi32>
    %75 = vector.broadcast %74 : vector<1x4xi32> to vector<64x4xi32>
    %76 = arith.cmpi eq, %75, %2 : vector<64x4xi32>
    %77 = arith.extui %76 : vector<64x4xi1> to vector<64x4xi32>
    %78 = arith.addi %71, %77 : vector<64x4xi32>
    %79 = vector.extract_strided_slice %0 {offsets = [11, 0], sizes = [1, 4], strides = [1, 1]} : vector<16x4xi32> to vector<1x4xi32>
    %80 = vector.shape_cast %79 : vector<1x4xi32> to vector<4xi32>
    %81 = vector.shape_cast %80 : vector<4xi32> to vector<1x4xi32>
    %82 = vector.broadcast %81 : vector<1x4xi32> to vector<64x4xi32>
    %83 = arith.cmpi eq, %82, %2 : vector<64x4xi32>
    %84 = arith.extui %83 : vector<64x4xi1> to vector<64x4xi32>
    %85 = arith.addi %78, %84 : vector<64x4xi32>
    %86 = vector.extract_strided_slice %0 {offsets = [12, 0], sizes = [1, 4], strides = [1, 1]} : vector<16x4xi32> to vector<1x4xi32>
    %87 = vector.shape_cast %86 : vector<1x4xi32> to vector<4xi32>
    %88 = vector.shape_cast %87 : vector<4xi32> to vector<1x4xi32>
    %89 = vector.broadcast %88 : vector<1x4xi32> to vector<64x4xi32>
    %90 = arith.cmpi eq, %89, %2 : vector<64x4xi32>
    %91 = arith.extui %90 : vector<64x4xi1> to vector<64x4xi32>
    %92 = arith.addi %85, %91 : vector<64x4xi32>
    %93 = vector.extract_strided_slice %0 {offsets = [13, 0], sizes = [1, 4], strides = [1, 1]} : vector<16x4xi32> to vector<1x4xi32>
    %94 = vector.shape_cast %93 : vector<1x4xi32> to vector<4xi32>
    %95 = vector.shape_cast %94 : vector<4xi32> to vector<1x4xi32>
    %96 = vector.broadcast %95 : vector<1x4xi32> to vector<64x4xi32>
    %97 = arith.cmpi eq, %96, %2 : vector<64x4xi32>
    %98 = arith.extui %97 : vector<64x4xi1> to vector<64x4xi32>
    %99 = arith.addi %92, %98 : vector<64x4xi32>
    %100 = vector.extract_strided_slice %0 {offsets = [14, 0], sizes = [1, 4], strides = [1, 1]} : vector<16x4xi32> to vector<1x4xi32>
    %101 = vector.shape_cast %100 : vector<1x4xi32> to vector<4xi32>
    %102 = vector.shape_cast %101 : vector<4xi32> to vector<1x4xi32>
    %103 = vector.broadcast %102 : vector<1x4xi32> to vector<64x4xi32>
    %104 = arith.cmpi eq, %103, %2 : vector<64x4xi32>
    %105 = arith.extui %104 : vector<64x4xi1> to vector<64x4xi32>
    %106 = arith.addi %99, %105 : vector<64x4xi32>
    %107 = vector.extract_strided_slice %0 {offsets = [15, 0], sizes = [1, 4], strides = [1, 1]} : vector<16x4xi32> to vector<1x4xi32>
    %108 = vector.shape_cast %107 : vector<1x4xi32> to vector<4xi32>
    %109 = vector.shape_cast %108 : vector<4xi32> to vector<1x4xi32>
    %110 = vector.broadcast %109 : vector<1x4xi32> to vector<64x4xi32>
    %111 = arith.cmpi eq, %110, %2 : vector<64x4xi32>
    %112 = arith.extui %111 : vector<64x4xi1> to vector<64x4xi32>
    %113 = arith.addi %106, %112 : vector<64x4xi32>
    %114 = arith.sitofp %113 : vector<64x4xi32> to vector<64x4xf32>
    %cst = arith.constant dense<0.000000e+00> : vector<4x128xf32>
    %115 = tpu.matmul %114, %1, %cst {dimension_numbers = #tpu.dot_dimension_numbers<[0], [0], [1], [1], [0, 1, 1, 1], [], []>} : vector<64x4xf32>, vector<64x128xf32>, vector<4x128xf32> -> vector<4x128xf32>
    %c0_3 = arith.constant 0 : index
    %c0_4 = arith.constant 0 : index
    %116 = vector.load %arg3[%c0_3, %c0_4] : memref<4x128xf32, #tpu.memory_space<vmem>>, vector<4x128xf32>
    tpu.vector_store %arg3[%c0_3, %c0_4], %115 {strides = array<i32>} : memref<4x128xf32, #tpu.memory_space<vmem>>, vector<4x128xf32>,
    return
  }
  func.func @transform_0(%arg0: i32) -> (i32, i32) {
    %c0_i32 = arith.constant 0 : i32
    %c0_i32_0 = arith.constant 0 : i32
    return %c0_i32, %arg0 : i32, i32
  }
  func.func @transform_1(%arg0: i32) -> (i32, i32) {
    %c0_i32 = arith.constant 0 : i32
    %c0_i32_0 = arith.constant 0 : i32
    %c0_i32_1 = arith.constant 0 : i32
    return %c0_i32, %c0_i32_0 : i32, i32
  }
  func.func @transform_2(%arg0: i32) -> (i32, i32) {
    %c0_i32 = arith.constant 0 : i32
    %c0_i32_0 = arith.constant 0 : i32
    return %arg0, %c0_i32 : i32, i32
  }
}

</mosaic_0001>

<llo_original>
// kernel: tpu_custom_call.1
$region0: #{tpu_custom_call.1}
  #allocation0 [shape = 'u32[]', space=smem, size = 0x4, offset = 0x4, fixed_abs, tag = 'smem constant byte address 0x4 - core index']
  #allocation1 [shape = 'u32[144,128]{1,0:T(1,128)}', space=vmem, size = 0x12000, scoped, tag = 'internal scratch']
  %s0 = inlined_call_operand.vmem [shape: s32[16,4], index: 0, kind: input, shape index: {}]
  %s1 = inlined_call_operand.hbm [shape: f32[64,128], index: 1, kind: input, shape index: {}]
  %s2 = inlined_call_operand.hbm [shape: f32[4,128], index: 2, kind: output, shape index: {}]
  %s3 = sld [smem:[#allocation0]]
  $region22: #{tpu_custom_call.1} parent=0
    _
  %s5 = ssub.s32 1, %s3
  %s6 = scalar_select 0, %s5, %s3
  $region1: #{tpu_custom_call.1} parent=0
    #allocation2 [shape = 'u8[32768]{0}', space=vmem, size = 0x8000, scoped, tag = 'input window, operand 1, single buffered']
    #allocation3 [shape = 's32[1]{0}', space=sflag, size = 0x4, scoped, tag = 'scoped memory for tpu_custom_call.1']
    #allocation4 [shape = 's32[1]{0}', space=sflag, size = 0x4, scoped, tag = 'scoped memory for tpu_custom_call.1']
    #allocation5 [shape = 'u8[2048]{0}', space=vmem, size = 0x800, scoped, tag = 'output window, operand 0, single buffered']
    %7 = vsyncpa [#allocation3], 0
    %8 = vsyncpa [#allocation4], 0
    // Predicated region
    $region2: #{tpu_custom_call.1} parent=1 // pred_check
      _
    $region3: #{tpu_custom_call.1} parent=1 // pred_check_branch
      %10 = sbr.rel (0) target = $region5
    $region4: #{tpu_custom_call.1} parent=1 // pred_region
      _
    $region5: #{tpu_custom_call.1} parent=1 // pred_fallthru
      _
    // Predicated region
    $region6: #{tpu_custom_call.1} parent=1 // pred_check
      _
    $region7: #{tpu_custom_call.1} parent=1 // pred_check_branch
      %12 = sbr.rel (0) target = $region9
    $region8: #{tpu_custom_call.1} parent=1 // pred_region
      %s14 = ssub.s32 1024, 1024
      %15 = vsyncadd [#allocation3], %s14
      %s16 = sshll.u32 [#allocation2], 4
      %s17 = int_to_ptr.vmem [resolvable:$true] %s16
      %22 = dma.hbm_to_vmem [thread:$0]  %s1, 1024, %s17, [#allocation3], 128, 128, 8
    $region9: #{tpu_custom_call.1} parent=1 // pred_fallthru
      _
    // Predicated region
    $region10: #{tpu_custom_call.1} parent=1 // pred_check
      _
    $region11: #{tpu_custom_call.1} parent=1 // pred_check_branch
      %24 = sbr.rel (0) target = $region13
    $region12: #{tpu_custom_call.1} parent=1 // pred_region
      %25 = dma.done [#allocation3], 1024
    $region13: #{tpu_custom_call.1} parent=1 // pred_fallthru
      _
    %v26 = vld [vmem:[%s0] sm:$0xff]
    %v27 = vld [vmem:[%s0 + $0x8] sm:$0xff]
    %v28 = vld [vmem:[#allocation2] sm:$0xff]
    %v29 = vld [vmem:[#allocation2 + $0x8] sm:$0xff]
    %v30 = vld [vmem:[#allocation2 + $0x10] sm:$0xff]
    %v31 = vld [vmem:[#allocation2 + $0x18] sm:$0xff]
    %v32 = vld [vmem:[#allocation2 + $0x20] sm:$0xff]
    %v33 = vld [vmem:[#allocation2 + $0x28] sm:$0xff]
    %v34 = vld [vmem:[#allocation2 + $0x30] sm:$0xff]
    %v35 = vld [vmem:[#allocation2 + $0x38] sm:$0xff]
    %v36 = vlaneseq
    %v37 = vshrl.u32 %v36, 7
    %v38 = vadd.s32 %v37, 8
    %v39 = vadd.s32 %v37, 16
    %v40 = vadd.s32 %v37, 24
    %v41 = vadd.s32 %v37, 32
    %v42 = vadd.s32 %v37, 40
    %v43 = vadd.s32 %v37, 48
    %v44 = vadd.s32 %v37, 56
    %v45 = vlaneseq
    %v46 = vshrl.u32 %v45, 7
    %v47 = vsub.s32 0, %v46
    %v48 = vrot.slane %v26, %v47
    %vm49 = vcmp.eq.s32.totalorder %v48, %v37
    %vm50 = vcmp.eq.s32.totalorder %v48, %v38
    %vm51 = vcmp.eq.s32.totalorder %v48, %v39
    %vm52 = vcmp.eq.s32.totalorder %v48, %v40
    %vm53 = vcmp.eq.s32.totalorder %v48, %v41
    %vm54 = vcmp.eq.s32.totalorder %v48, %v42
    %vm55 = vcmp.eq.s32.totalorder %v48, %v43
    %vm56 = vcmp.eq.s32.totalorder %v48, %v44
    %v57 = vsel %vm49, 1, 0
    %v58 = vsel %vm50, 1, 0
    %v59 = vsel %vm51, 1, 0
    %v60 = vsel %vm52, 1, 0
    %v61 = vsel %vm53, 1, 0
    %v62 = vsel %vm54, 1, 0
    %v63 = vsel %vm55, 1, 0
    %v64 = vsel %vm56, 1, 0
    %v65 = vlaneseq
    %v66 = vshrl.u32 %v65, 7
    %v67 = vsub.s32 1, %v66
    %v68 = vrot.slane %v26, %v67
    %vm69 = vcmp.eq.s32.totalorder %v68, %v37
    %vm70 = vcmp.eq.s32.totalorder %v68, %v38
    %vm71 = vcmp.eq.s32.totalorder %v68, %v39
    %vm72 = vcmp.eq.s32.totalorder %v68, %v40
    %vm73 = vcmp.eq.s32.totalorder %v68, %v41
    %vm74 = vcmp.eq.s32.totalorder %v68, %v42
    %vm75 = vcmp.eq.s32.totalorder %v68, %v43
    %vm76 = vcmp.eq.s32.totalorder %v68, %v44
    %v77 = vsel %vm69, 1, 0
    %v78 = vsel %vm70, 1, 0
    %v79 = vsel %vm71, 1, 0
    %v80 = vsel %vm72, 1, 0
    %v81 = vsel %vm73, 1, 0
    %v82 = vsel %vm74, 1, 0
    %v83 = vsel %vm75, 1, 0
    %v84 = vsel %vm76, 1, 0
    %v85 = vadd.s32 %v57, %v77
    %v86 = vadd.s32 %v58, %v78
    %v87 = vadd.s32 %v59, %v79
    %v88 = vadd.s32 %v60, %v80
    %v89 = vadd.s32 %v61, %v81
    %v90 = vadd.s32 %v62, %v82
    %v91 = vadd.s32 %v63, %v83
    %v92 = vadd.s32 %v64, %v84
    %v93 = vlaneseq
    %v94 = vshrl.u32 %v93, 7
    %v95 = vsub.s32 2, %v94
    %v96 = vrot.slane %v26, %v95
    %vm97 = vcmp.eq.s32.totalorder %v96, %v37
    %vm98 = vcmp.eq.s32.totalorder %v96, %v38
    %vm99 = vcmp.eq.s32.totalorder %v96, %v39
    %vm100 = vcmp.eq.s32.totalorder %v96, %v40
    %vm101 = vcmp.eq.s32.totalorder %v96, %v41
    %vm102 = vcmp.eq.s32.totalorder %v96, %v42
    %vm103 = vcmp.eq.s32.totalorder %v96, %v43
    %vm104 = vcmp.eq.s32.totalorder %v96, %v44
    %v105 = vsel %vm97, 1, 0
    %v106 = vsel %vm98, 1, 0
    %v107 = vsel %vm99, 1, 0
    %v108 = vsel %vm100, 1, 0
    %v109 = vsel %vm101, 1, 0
    %v110 = vsel %vm102, 1, 0
    %v111 = vsel %vm103, 1, 0
    %v112 = vsel %vm104, 1, 0
    %v113 = vadd.s32 %v85, %v105
    %v114 = vadd.s32 %v86, %v106
    %v115 = vadd.s32 %v87, %v107
    %v116 = vadd.s32 %v88, %v108
    %v117 = vadd.s32 %v89, %v109
    %v118 = vadd.s32 %v90, %v110
    %v119 = vadd.s32 %v91, %v111
    %v120 = vadd.s32 %v92, %v112
    %v121 = vlaneseq
    %v122 = vshrl.u32 %v121, 7
    %v123 = vsub.s32 3, %v122
    %v124 = vrot.slane %v26, %v123
    %vm125 = vcmp.eq.s32.totalorder %v124, %v37
    %vm126 = vcmp.eq.s32.totalorder %v124, %v38
    %vm127 = vcmp.eq.s32.totalorder %v124, %v39
    %vm128 = vcmp.eq.s32.totalorder %v124, %v40
    %vm129 = vcmp.eq.s32.totalorder %v124, %v41
    %vm130 = vcmp.eq.s32.totalorder %v124, %v42
    %vm131 = vcmp.eq.s32.totalorder %v124, %v43
    %vm132 = vcmp.eq.s32.totalorder %v124, %v44
    %v133 = vsel %vm125, 1, 0
    %v134 = vsel %vm126, 1, 0
    %v135 = vsel %vm127, 1, 0
    %v136 = vsel %vm128, 1, 0
    %v137 = vsel %vm129, 1, 0
    %v138 = vsel %vm130, 1, 0
    %v139 = vsel %vm131, 1, 0
    %v140 = vsel %vm132, 1, 0
    %v141 = vadd.s32 %v113, %v133
    %v142 = vadd.s32 %v114, %v134
    %v143 = vadd.s32 %v115, %v135
    %v144 = vadd.s32 %v116, %v136
    %v145 = vadd.s32 %v117, %v137
    %v146 = vadd.s32 %v118, %v138
    %v147 = vadd.s32 %v119, %v139
    %v148 = vadd.s32 %v120, %v140
    %v149 = vlaneseq
    %v150 = vshrl.u32 %v149, 7
    %v151 = vsub.s32 4, %v150
    %v152 = vrot.slane %v26, %v151
    %vm153 = vcmp.eq.s32.totalorder %v152, %v37
    %vm154 = vcmp.eq.s32.totalorder %v152, %v38
    %vm155 = vcmp.eq.s32.totalorder %v152, %v39
    %vm156 = vcmp.eq.s32.totalorder %v152, %v40
    %vm157 = vcmp.eq.s32.totalorder %v152, %v41
    %vm158 = vcmp.eq.s32.totalorder %v152, %v42
    %vm159 = vcmp.eq.s32.totalorder %v152, %v43
    %vm160 = vcmp.eq.s32.totalorder %v152, %v44
    %v161 = vsel %vm153, 1, 0
    %v162 = vsel %vm154, 1, 0
    %v163 = vsel %vm155, 1, 0
    %v164 = vsel %vm156, 1, 0
    %v165 = vsel %vm157, 1, 0
    %v166 = vsel %vm158, 1, 0
    %v167 = vsel %vm159, 1, 0
    %v168 = vsel %vm160, 1, 0
    %v169 = vadd.s32 %v141, %v161
    %v170 = vadd.s32 %v142, %v162
    %v171 = vadd.s32 %v143, %v163
    %v172 = vadd.s32 %v144, %v164
    %v173 = vadd.s32 %v145, %v165
    %v174 = vadd.s32 %v146, %v166
    %v175 = vadd.s32 %v147, %v167
    %v176 = vadd.s32 %v148, %v168
    %v177 = vlaneseq
    %v178 = vshrl.u32 %v177, 7
    %v179 = vsub.s32 5, %v178
    %v180 = vrot.slane %v26, %v179
    %vm181 = vcmp.eq.s32.totalorder %v180, %v37
    %vm182 = vcmp.eq.s32.totalorder %v180, %v38
    %vm183 = vcmp.eq.s32.totalorder %v180, %v39
    %vm184 = vcmp.eq.s32.totalorder %v180, %v40
    %vm185 = vcmp.eq.s32.totalorder %v180, %v41
    %vm186 = vcmp.eq.s32.totalorder %v180, %v42
    %vm187 = vcmp.eq.s32.totalorder %v180, %v43
    %vm188 = vcmp.eq.s32.totalorder %v180, %v44
    %v189 = vsel %vm181, 1, 0
    %v190 = vsel %vm182, 1, 0
    %v191 = vsel %vm183, 1, 0
    %v192 = vsel %vm184, 1, 0
    %v193 = vsel %vm185, 1, 0
    %v194 = vsel %vm186, 1, 0
    %v195 = vsel %vm187, 1, 0
    %v196 = vsel %vm188, 1, 0
    %v197 = vadd.s32 %v169, %v189
    %v198 = vadd.s32 %v170, %v190
    %v199 = vadd.s32 %v171, %v191
    %v200 = vadd.s32 %v172, %v192
    %v201 = vadd.s32 %v173, %v193
    %v202 = vadd.s32 %v174, %v194
    %v203 = vadd.s32 %v175, %v195
    %v204 = vadd.s32 %v176, %v196
    %v205 = vlaneseq
    %v206 = vshrl.u32 %v205, 7
    %v207 = vsub.s32 6, %v206
    %v208 = vrot.slane %v26, %v207
    %vm209 = vcmp.eq.s32.totalorder %v208, %v37
    %vm210 = vcmp.eq.s32.totalorder %v208, %v38
    %vm211 = vcmp.eq.s32.totalorder %v208, %v39
    %vm212 = vcmp.eq.s32.totalorder %v208, %v40
    %vm213 = vcmp.eq.s32.totalorder %v208, %v41
    %vm214 = vcmp.eq.s32.totalorder %v208, %v42
    %vm215 = vcmp.eq.s32.totalorder %v208, %v43
    %vm216 = vcmp.eq.s32.totalorder %v208, %v44
    %v217 = vsel %vm209, 1, 0
    %v218 = vsel %vm210, 1, 0
    %v219 = vsel %vm211, 1, 0
    %v220 = vsel %vm212, 1, 0
    %v221 = vsel %vm213, 1, 0
    %v222 = vsel %vm214, 1, 0
    %v223 = vsel %vm215, 1, 0
    %v224 = vsel %vm216, 1, 0
    %v225 = vadd.s32 %v197, %v217
    %v226 = vadd.s32 %v198, %v218
    %v227 = vadd.s32 %v199, %v219
    %v228 = vadd.s32 %v200, %v220
    %v229 = vadd.s32 %v201, %v221
    %v230 = vadd.s32 %v202, %v222
    %v231 = vadd.s32 %v203, %v223
    %v232 = vadd.s32 %v204, %v224
    %v233 = vlaneseq
    %v234 = vshrl.u32 %v233, 7
    %v235 = vsub.s32 7, %v234
    %v236 = vrot.slane %v26, %v235
    %vm237 = vcmp.eq.s32.totalorder %v236, %v37
    %vm238 = vcmp.eq.s32.totalorder %v236, %v38
    %vm239 = vcmp.eq.s32.totalorder %v236, %v39
    %vm240 = vcmp.eq.s32.totalorder %v236, %v40
    %vm241 = vcmp.eq.s32.totalorder %v236, %v41
    %vm242 = vcmp.eq.s32.totalorder %v236, %v42
    %vm243 = vcmp.eq.s32.totalorder %v236, %v43
    %vm244 = vcmp.eq.s32.totalorder %v236, %v44
    %v245 = vsel %vm237, 1, 0
    %v246 = vsel %vm238, 1, 0
    %v247 = vsel %vm239, 1, 0
    %v248 = vsel %vm240, 1, 0
    %v249 = vsel %vm241, 1, 0
    %v250 = vsel %vm242, 1, 0
    %v251 = vsel %vm243, 1, 0
    %v252 = vsel %vm244, 1, 0
    %v253 = vadd.s32 %v225, %v245
    %v254 = vadd.s32 %v226, %v246
    %v255 = vadd.s32 %v227, %v247
    %v256 = vadd.s32 %v228, %v248
    %v257 = vadd.s32 %v229, %v249
    %v258 = vadd.s32 %v230, %v250
    %v259 = vadd.s32 %v231, %v251
    %v260 = vadd.s32 %v232, %v252
    %v261 = vlaneseq
    %v262 = vshrl.u32 %v261, 7
    %v263 = vsub.s32 0, %v262
    %v264 = vrot.slane %v27, %v263
    %vm265 = vcmp.eq.s32.totalorder %v264, %v37
    %vm266 = vcmp.eq.s32.totalorder %v264, %v38
    %vm267 = vcmp.eq.s32.totalorder %v264, %v39
    %vm268 = vcmp.eq.s32.totalorder %v264, %v40
    %vm269 = vcmp.eq.s32.totalorder %v264, %v41
    %vm270 = vcmp.eq.s32.totalorder %v264, %v42
    %vm271 = vcmp.eq.s32.totalorder %v264, %v43
    %vm272 = vcmp.eq.s32.totalorder %v264, %v44
    %v273 = vsel %vm265, 1, 0
    %v274 = vsel %vm266, 1, 0
    %v275 = vsel %vm267, 1, 0
    %v276 = vsel %vm268, 1, 0
    %v277 = vsel %vm269, 1, 0
    %v278 = vsel %vm270, 1, 0
    %v279 = vsel %vm271, 1, 0
    %v280 = vsel %vm272, 1, 0
    %v281 = vadd.s32 %v253, %v273
    %v282 = vadd.s32 %v254, %v274
    %v283 = vadd.s32 %v255, %v275
    %v284 = vadd.s32 %v256, %v276
    %v285 = vadd.s32 %v257, %v277
    %v286 = vadd.s32 %v258, %v278
    %v287 = vadd.s32 %v259, %v279
    %v288 = vadd.s32 %v260, %v280
    %v289 = vlaneseq
    %v290 = vshrl.u32 %v289, 7
    %v291 = vsub.s32 1, %v290
    %v292 = vrot.slane %v27, %v291
    %vm293 = vcmp.eq.s32.totalorder %v292, %v37
    %vm294 = vcmp.eq.s32.totalorder %v292, %v38
    %vm295 = vcmp.eq.s32.totalorder %v292, %v39
    %vm296 = vcmp.eq.s32.totalorder %v292, %v40
    %vm297 = vcmp.eq.s32.totalorder %v292, %v41
    %vm298 = vcmp.eq.s32.totalorder %v292, %v42
    %vm299 = vcmp.eq.s32.totalorder %v292, %v43
    %vm300 = vcmp.eq.s32.totalorder %v292, %v44
    %v301 = vsel %vm293, 1, 0
    %v302 = vsel %vm294, 1, 0
    %v303 = vsel %vm295, 1, 0
    %v304 = vsel %vm296, 1, 0
    %v305 = vsel %vm297, 1, 0
    %v306 = vsel %vm298, 1, 0
    %v307 = vsel %vm299, 1, 0
    %v308 = vsel %vm300, 1, 0
    %v309 = vadd.s32 %v281, %v301
    %v310 = vadd.s32 %v282, %v302
    %v311 = vadd.s32 %v283, %v303
    %v312 = vadd.s32 %v284, %v304
    %v313 = vadd.s32 %v285, %v305
    %v314 = vadd.s32 %v286, %v306
    %v315 = vadd.s32 %v287, %v307
    %v316 = vadd.s32 %v288, %v308
    %v317 = vlaneseq
    %v318 = vshrl.u32 %v317, 7
    %v319 = vsub.s32 2, %v318
    %v320 = vrot.slane %v27, %v319
    %vm321 = vcmp.eq.s32.totalorder %v320, %v37
    %vm322 = vcmp.eq.s32.totalorder %v320, %v38
    %vm323 = vcmp.eq.s32.totalorder %v320, %v39
    %vm324 = vcmp.eq.s32.totalorder %v320, %v40
    %vm325 = vcmp.eq.s32.totalorder %v320, %v41
    %vm326 = vcmp.eq.s32.totalorder %v320, %v42
    %vm327 = vcmp.eq.s32.totalorder %v320, %v43
    %vm328 = vcmp.eq.s32.totalorder %v320, %v44
    %v329 = vsel %vm321, 1, 0
    %v330 = vsel %vm322, 1, 0
    %v331 = vsel %vm323, 1, 0
    %v332 = vsel %vm324, 1, 0
    %v333 = vsel %vm325, 1, 0
    %v334 = vsel %vm326, 1, 0
    %v335 = vsel %vm327, 1, 0
    %v336 = vsel %vm328, 1, 0
    %v337 = vadd.s32 %v309, %v329
    %v338 = vadd.s32 %v310, %v330
    %v339 = vadd.s32 %v311, %v331
    %v340 = vadd.s32 %v312, %v332
    %v341 = vadd.s32 %v313, %v333
    %v342 = vadd.s32 %v314, %v334
    %v343 = vadd.s32 %v315, %v335
    %v344 = vadd.s32 %v316, %v336
    %v345 = vlaneseq
    %v346 = vshrl.u32 %v345, 7
    %v347 = vsub.s32 3, %v346
    %v348 = vrot.slane %v27, %v347
    %vm349 = vcmp.eq.s32.totalorder %v348, %v37
    %vm350 = vcmp.eq.s32.totalorder %v348, %v38
    %vm351 = vcmp.eq.s32.totalorder %v348, %v39
    %vm352 = vcmp.eq.s32.totalorder %v348, %v40
    %vm353 = vcmp.eq.s32.totalorder %v348, %v41
    %vm354 = vcmp.eq.s32.totalorder %v348, %v42
    %vm355 = vcmp.eq.s32.totalorder %v348, %v43
    %vm356 = vcmp.eq.s32.totalorder %v348, %v44
    %v357 = vsel %vm349, 1, 0
    %v358 = vsel %vm350, 1, 0
    %v359 = vsel %vm351, 1, 0
    %v360 = vsel %vm352, 1, 0
    %v361 = vsel %vm353, 1, 0
    %v362 = vsel %vm354, 1, 0
    %v363 = vsel %vm355, 1, 0
    %v364 = vsel %vm356, 1, 0
    %v365 = vadd.s32 %v337, %v357
    %v366 = vadd.s32 %v338, %v358
    %v367 = vadd.s32 %v339, %v359
    %v368 = vadd.s32 %v340, %v360
    %v369 = vadd.s32 %v341, %v361
    %v370 = vadd.s32 %v342, %v362
    %v371 = vadd.s32 %v343, %v363
    %v372 = vadd.s32 %v344, %v364
    %v373 = vlaneseq
    %v374 = vshrl.u32 %v373, 7
    %v375 = vsub.s32 4, %v374
    %v376 = vrot.slane %v27, %v375
    %vm377 = vcmp.eq.s32.totalorder %v376, %v37
    %vm378 = vcmp.eq.s32.totalorder %v376, %v38
    %vm379 = vcmp.eq.s32.totalorder %v376, %v39
    %vm380 = vcmp.eq.s32.totalorder %v376, %v40
    %vm381 = vcmp.eq.s32.totalorder %v376, %v41
    %vm382 = vcmp.eq.s32.totalorder %v376, %v42
    %vm383 = vcmp.eq.s32.totalorder %v376, %v43
    %vm384 = vcmp.eq.s32.totalorder %v376, %v44
    %v385 = vsel %vm377, 1, 0
    %v386 = vsel %vm378, 1, 0
    %v387 = vsel %vm379, 1, 0
    %v388 = vsel %vm380, 1, 0
    %v389 = vsel %vm381, 1, 0
    %v390 = vsel %vm382, 1, 0
    %v391 = vsel %vm383, 1, 0
    %v392 = vsel %vm384, 1, 0
    %v393 = vadd.s32 %v365, %v385
    %v394 = vadd.s32 %v366, %v386
    %v395 = vadd.s32 %v367, %v387
    %v396 = vadd.s32 %v368, %v388
    %v397 = vadd.s32 %v369, %v389
    %v398 = vadd.s32 %v370, %v390
    %v399 = vadd.s32 %v371, %v391
    %v400 = vadd.s32 %v372, %v392
    %v401 = vlaneseq
    %v402 = vshrl.u32 %v401, 7
    %v403 = vsub.s32 5, %v402
    %v404 = vrot.slane %v27, %v403
    %vm405 = vcmp.eq.s32.totalorder %v404, %v37
    %vm406 = vcmp.eq.s32.totalorder %v404, %v38
    %vm407 = vcmp.eq.s32.totalorder %v404, %v39
    %vm408 = vcmp.eq.s32.totalorder %v404, %v40
    %vm409 = vcmp.eq.s32.totalorder %v404, %v41
    %vm410 = vcmp.eq.s32.totalorder %v404, %v42
    %vm411 = vcmp.eq.s32.totalorder %v404, %v43
    %vm412 = vcmp.eq.s32.totalorder %v404, %v44
    %v413 = vsel %vm405, 1, 0
    %v414 = vsel %vm406, 1, 0
    %v415 = vsel %vm407, 1, 0
    %v416 = vsel %vm408, 1, 0
    %v417 = vsel %vm409, 1, 0
    %v418 = vsel %vm410, 1, 0
    %v419 = vsel %vm411, 1, 0
    %v420 = vsel %vm412, 1, 0
    %v421 = vadd.s32 %v393, %v413
    %v422 = vadd.s32 %v394, %v414
    %v423 = vadd.s32 %v395, %v415
    %v424 = vadd.s32 %v396, %v416
    %v425 = vadd.s32 %v397, %v417
    %v426 = vadd.s32 %v398, %v418
    %v427 = vadd.s32 %v399, %v419
    %v428 = vadd.s32 %v400, %v420
    %v429 = vlaneseq
    %v430 = vshrl.u32 %v429, 7
    %v431 = vsub.s32 6, %v430
    %v432 = vrot.slane %v27, %v431
    %vm433 = vcmp.eq.s32.totalorder %v432, %v37
    %vm434 = vcmp.eq.s32.totalorder %v432, %v38
    %vm435 = vcmp.eq.s32.totalorder %v432, %v39
    %vm436 = vcmp.eq.s32.totalorder %v432, %v40
    %vm437 = vcmp.eq.s32.totalorder %v432, %v41
    %vm438 = vcmp.eq.s32.totalorder %v432, %v42
    %vm439 = vcmp.eq.s32.totalorder %v432, %v43
    %vm440 = vcmp.eq.s32.totalorder %v432, %v44
    %v441 = vsel %vm433, 1, 0
    %v442 = vsel %vm434, 1, 0
    %v443 = vsel %vm435, 1, 0
    %v444 = vsel %vm436, 1, 0
    %v445 = vsel %vm437, 1, 0
    %v446 = vsel %vm438, 1, 0
    %v447 = vsel %vm439, 1, 0
    %v448 = vsel %vm440, 1, 0
    %v449 = vadd.s32 %v421, %v441
    %v450 = vadd.s32 %v422, %v442
    %v451 = vadd.s32 %v423, %v443
    %v452 = vadd.s32 %v424, %v444
    %v453 = vadd.s32 %v425, %v445
    %v454 = vadd.s32 %v426, %v446
    %v455 = vadd.s32 %v427, %v447
    %v456 = vadd.s32 %v428, %v448
    %v457 = vlaneseq
    %v458 = vshrl.u32 %v457, 7
    %v459 = vsub.s32 7, %v458
    %v460 = vrot.slane %v27, %v459
    %vm461 = vcmp.eq.s32.totalorder %v460, %v37
    %vm462 = vcmp.eq.s32.totalorder %v460, %v38
    %vm463 = vcmp.eq.s32.totalorder %v460, %v39
    %vm464 = vcmp.eq.s32.totalorder %v460, %v40
    %vm465 = vcmp.eq.s32.totalorder %v460, %v41
    %vm466 = vcmp.eq.s32.totalorder %v460, %v42
    %vm467 = vcmp.eq.s32.totalorder %v460, %v43
    %vm468 = vcmp.eq.s32.totalorder %v460, %v44
    %v469 = vsel %vm461, 1, 0
    %v470 = vsel %vm462, 1, 0
    %v471 = vsel %vm463, 1, 0
    %v472 = vsel %vm464, 1, 0
    %v473 = vsel %vm465, 1, 0
    %v474 = vsel %vm466, 1, 0
    %v475 = vsel %vm467, 1, 0
    %v476 = vsel %vm468, 1, 0
    %v477 = vadd.s32 %v449, %v469
    %v478 = vadd.s32 %v450, %v470
    %v479 = vadd.s32 %v451, %v471
    %v480 = vadd.s32 %v452, %v472
    %v481 = vadd.s32 %v453, %v473
    %v482 = vadd.s32 %v454, %v474
    %v483 = vadd.s32 %v455, %v475
    %v484 = vadd.s32 %v456, %v476
    %v485 = vcvt.s32.f32 %v477
    %v486 = vcvt.s32.f32 %v478
    %v487 = vcvt.s32.f32 %v479
    %v488 = vcvt.s32.f32 %v480
    %v489 = vcvt.s32.f32 %v481
    %v490 = vcvt.s32.f32 %v482
    %v491 = vcvt.s32.f32 %v483
    %v492 = vcvt.s32.f32 %v484
    %493 = vxpose.xlu0.b32.start [1/16] %v485, 128
    %494 = vxpose.xlu0.b32.cont [2/16] %v486, 128
    %495 = vxpose.xlu0.b32.cont [3/16] %v487, 128
    %496 = vxpose.xlu0.b32.cont [4/16] %v488, 128
    %497 = vxpose.xlu0.b32.cont [5/16] %v489, 128
    %498 = vxpose.xlu0.b32.cont [6/16] %v490, 128
    %499 = vxpose.xlu0.b32.cont [7/16] %v491, 128
    %500 = vxpose.xlu0.b32.cont [8/16] %v492, 128
    %501 = vxpose.xlu0.b32.cont [9/16] 0.0, 128
    %502 = vxpose.xlu0.b32.cont [10/16] 0.0, 128
    %503 = vxpose.xlu0.b32.cont [11/16] 0.0, 128
    %504 = vxpose.xlu0.b32.cont [12/16] 0.0, 128
    %505 = vxpose.xlu0.b32.cont [13/16] 0.0, 128
    %506 = vxpose.xlu0.b32.cont [14/16] 0.0, 128
    %507 = vxpose.xlu0.b32.cont [15/16] 0.0, 128
    %508 = vxpose.xlu0.b32.end [16/16] 0.0, 128
    %v509 = vpop.trf.xlu0
    %v510 = vpop.trf.xlu0
    %v511 = vpop.trf.xlu0
    %v512 = vpop.trf.xlu0
    %v513 = vpop.trf.xlu0
    %v514 = vpop.trf.xlu0
    %v515 = vpop.trf.xlu0
    %v516 = vpop.trf.xlu0
    %v517 = vpop.trf.xlu0
    %v518 = vpop.trf.xlu0
    %v519 = vpop.trf.xlu0
    %v520 = vpop.trf.xlu0
    %v521 = vpop.trf.xlu0
    %v522 = vpop.trf.xlu0
    %v523 = vpop.trf.xlu0
    %v524 = vpop.trf.xlu0
    %vm525 = vcmask 523264
    %v527 = vsel %vm525, %v509, 0
    %529 = vmatprep.subr.mxu0 0.0
    %530 = vmatpush1.msra.mxu0 0.0
    %531 = vmatprep.subr.mxu0 0.0
    %532 = vmatpush1.msra.mxu0 0.0
    %533 = vmatprep.subr.mxu0 0.0
    %534 = vmatpush1.msra.mxu0 0.0
    %535 = vmatprep.subr.mxu0 0.0
    %536 = vmatpush1.msra.mxu0 0.0
    %537 = vmatprep.subr.mxu0 0.0
    %538 = vmatpush1.msra.mxu0 0.0
    %539 = vmatprep.subr.mxu0 0.0
    %540 = vmatpush1.msra.mxu0 0.0
    %541 = vmatprep.subr.mxu0 0.0
    %542 = vmatpush1.msra.mxu0 0.0
    %543 = vmatprep.subr.mxu0 0.0
    %544 = vmatpush1.msra.mxu0 0.0
    %545 = vmatprep.subr.mxu0 0.0
    %546 = vmatpush1.msra.mxu0 %v35
    %547 = vmatprep.subr.mxu0 0.0
    %548 = vmatpush1.msra.mxu0 %v34
    %549 = vmatprep.subr.mxu0 0.0
    %550 = vmatpush1.msra.mxu0 %v33
    %551 = vmatprep.subr.mxu0 0.0
    %552 = vmatpush1.msra.mxu0 %v32
    %553 = vmatprep.subr.mxu0 0.0
    %554 = vmatpush1.msra.mxu0 %v31
    %555 = vmatprep.subr.mxu0 0.0
    %556 = vmatpush1.msra.mxu0 %v30
    %557 = vmatprep.subr.mxu0 0.0
    %558 = vmatpush1.msra.mxu0 %v29
    %559 = vmatprep.subr.mxu0 0.0
    %560 = vmatpush1.msra.mxu0 %v28
    %561 = vmatprep.subr.mxu0 0.0
    %562 = vmatpush2.msra.mxu0 0.0
    %563 = vmatprep.subr.mxu0 0.0
    %564 = vmatpush2.msra.mxu0 0.0
    %565 = vmatprep.subr.mxu0 0.0
    %566 = vmatpush2.msra.mxu0 0.0
    %567 = vmatprep.subr.mxu0 0.0
    %568 = vmatpush2.msra.mxu0 0.0
    %569 = vmatprep.subr.mxu0 0.0
    %570 = vmatpush2.msra.mxu0 0.0
    %571 = vmatprep.subr.mxu0 0.0
    %572 = vmatpush2.msra.mxu0 0.0
    %573 = vmatprep.subr.mxu0 0.0
    %574 = vmatpush2.msra.mxu0 0.0
    %575 = vmatprep.subr.mxu0 0.0
    %576 = vmatpush2.msra.mxu0 0.0
    %577 = vmatprep.subr.mxu0 0.0
    %578 = vmatpush2.msra.mxu0 0.0
    %579 = vmatprep.subr.mxu0 0.0
    %580 = vmatpush2.msra.mxu0 0.0
    %581 = vmatprep.subr.mxu0 0.0
    %582 = vmatpush2.msra.mxu0 0.0
    %583 = vmatprep.subr.mxu0 0.0
    %584 = vmatpush2.msra.mxu0 0.0
    %585 = vmatprep.subr.mxu0 0.0
    %586 = vmatpush2.msra.mxu0 0.0
    %587 = vmatprep.subr.mxu0 0.0
    %588 = vmatpush2.msra.mxu0 0.0
    %589 = vmatprep.subr.mxu0 0.0
    %590 = vmatpush2.msra.mxu0 0.0
    %591 = vmatprep.subr.mxu0 0.0
    %592 = vmatpush2.msra.mxu0 0.0
    %593 = vmatprep.mubr.f32.mxu0 0.0
    %594 = vmatmul.mubr.f32.gmra.mxu0 %v527
    %v595 = vpop.f32.mrf.mxu0
    %v596 = vadd.f32 0.0, %v595
    %v597 = vpop.f32.mrf.mxu0
    %598 = vdwg.mxu0
    %599 = vst [vmem:[#allocation5] sm:$0xf] %v596
    // Predicated region
    $region14: #{tpu_custom_call.1} parent=1 // pred_check
      _
    $region15: #{tpu_custom_call.1} parent=1 // pred_check_branch
      %601 = sbr.rel (0) target = $region17
    $region16: #{tpu_custom_call.1} parent=1 // pred_region
      %s603 = ssub.s32 64, 64
      %604 = vsyncadd [#allocation4], %s603
      %s606 = sshll.u32 [#allocation5], 4
      %s607 = int_to_ptr.vmem [resolvable:$true] %s606
      %609 = dma.vmem_to_hbm [thread:$0]  %s607, 64, %s2, [#allocation4]
    $region17: #{tpu_custom_call.1} parent=1 // pred_fallthru
      _
    // Predicated region
    $region18: #{tpu_custom_call.1} parent=1 // pred_check
      _
    $region19: #{tpu_custom_call.1} parent=1 // pred_check_branch
      %611 = sbr.rel (0) target = $region21
    $region20: #{tpu_custom_call.1} parent=1 // pred_region
      %612 = dma.done [#allocation4], 64
    $region21: #{tpu_custom_call.1} parent=1 // pred_fallthru
      _
    %613 = vsyncpa [#allocation3], 1
    %614 = vsyncpa [#allocation4], 1

</llo_original>
